<compile_context>
chip_gen: v7x
topology: tpu7x:2x2x1
jax: 0.10.0
libtpu: 0.0.40
codegen_flags: <defaults>
</compile_context>

<pallas_src>
import jax
import jax.numpy as jnp
from jax.experimental import pallas as pl
from jax.experimental.pallas import tpu as pltpu

LN_EPS = 1e-5


# ---------------------------------------------------------------------------
# Tiling helpers
# ---------------------------------------------------------------------------
def _round_up(x, m):
    return ((x + m - 1) // m) * m


def _sublane_multiple(dtype):
    size = jnp.dtype(dtype).itemsize
    if size >= 4:
        return 8
    if size == 2:
        return 16
    return 32


def _choose_tile_n(N, dtype, d_model, *, x_buf_budget=4 << 20, max_rows=1024,
                   min_steps=1):
    """Pick the token tile tN and the (possibly padded) N.

    tN is a multiple of the dtype's sublane packing (8/16/32), bounded by a
    per-buffer VMEM budget and max_rows.  If N has no aligned divisor <= cap,
    N is padded up (the wrapper slices the result back).  min_steps>1 asks for
    at least that many grid steps along N (v7x megacore with B==1).
    """
    sub = _sublane_multiple(dtype)
    itemsize = jnp.dtype(dtype).itemsize
    rows_fit = x_buf_budget // max(1, d_model * itemsize)
    cap = max(sub, min(max_rows, (rows_fit // sub) * sub))

    if N <= cap:
        tN = N
        if min_steps > 1 and N % sub == 0 and N >= min_steps * sub:
            t = _round_up(-(-N // min_steps), sub)   # ceil(N/min_steps), aligned
            while t >= sub and N % t:
                t -= sub
            if t >= sub:
                tN = t
        return tN, N

    t = cap
    while t >= sub:
        if N % t == 0:
            return t, N
        t -= sub
    # No aligned divisor: pad N so the pipeline still gets many uniform steps.
    return cap, _round_up(N, cap)


def _vmem_limit(bytes_needed):
    # Margin for compiler-internal scratch; clamp to a range that is legal on
    # v5e (16 MiB default scoped VMEM) and safe on v7x (64 MiB physical).
    return int(min(max(int(bytes_needed * 1.25) + (2 << 20), 16 << 20), 64 << 20))


# ---------------------------------------------------------------------------
# Fused PreNorm + Linear kernel: y = LayerNorm(x) @ W + bias
# ---------------------------------------------------------------------------
def _prenorm_linear_kernel(x_ref, g_ref, be_ref, w_ref, bias_ref, o_ref, y_scr):
    # x_ref: (tN, D)   g_ref/be_ref: (1, D)
    # w_ref: (D, tDp)  bias_ref: (1, tDp)
    # o_ref: (tN, out_dp)   y_scr: (tN, D) in the MXU compute dtype
    @pl.when(pl.program_id(2) == 0)
    def _():
        # Two-pass (centered) LayerNorm statistics in f32.
        x = x_ref[...].astype(jnp.float32)
        inv_d = jnp.float32(1.0 / x.shape[-1])
        mean = jnp.sum(x, axis=-1, keepdims=True) * inv_d      # XLU reduce
        xc = x - mean
        var = jnp.sum(xc * xc, axis=-1, keepdims=True) * inv_d
        x_hat = xc * jax.lax.rsqrt(var + LN_EPS)                # rsqrt -> EUP
        y = (x_hat * g_ref[...].astype(jnp.float32)
             + be_ref[...].astype(jnp.float32))
        y_scr[...] = y.astype(y_scr.dtype)

    # Clean 2-D matmul on the MXU, f32 accumulation.
    out = jnp.dot(y_scr[...], w_ref[...], preferred_element_type=jnp.float32)
    out = out + bias_ref[...].astype(jnp.float32)
    # Store only the logical columns (masked store when D_out < padded width):
    # avoids a post-kernel slice (an extra HBM pass) and padded HBM writes.
    o_ref[...] = out[:, : o_ref.shape[-1]].astype(o_ref.dtype)


def prenorm_linear_pallas(x, gamma, beta, w, b, *, mxu_dtype=None):
    B, N, D = x.shape
    D_out = w.shape[1]

    if mxu_dtype is None:
        # bf16 MXU path when any operand is already <=16-bit; keep f32 matmul
        # for f32 inputs/weights so forward numerics match nn.Linear in f32.
        if (jnp.dtype(x.dtype).itemsize <= 2
                or jnp.dtype(w.dtype).itemsize <= 2):
            mxu_dtype = jnp.bfloat16
        else:
            mxu_dtype = jnp.float32

    # ---- output-column (Dp) tiling -------------------------------------
    if D_out % 128 == 0:
        Dp = D_out
        tDp = min(Dp, 512)
        while Dp % tDp:          # Dp is a multiple of 128, terminates at 128
            tDp -= 128
    else:
        Dp = _round_up(D_out, 128)   # lane-dense weight for the MXU
        tDp = Dp                     # single column tile; kernel stores :D_out
    n_dp = Dp // tDp
    out_tile_dp = D_out if n_dp == 1 else tDp

    w_p = w if Dp == D_out else jnp.pad(w, ((0, 0), (0, Dp - D_out)))
    b_p = b if Dp == D_out else jnp.pad(b, (0, Dp - D_out))
    w_p = w_p.astype(mxu_dtype)

    g2 = gamma.reshape(1, D).astype(jnp.float32)
    be2 = beta.reshape(1, D).astype(jnp.float32)
    bias2 = b_p.reshape(1, Dp).astype(jnp.float32)

    # ---- token (N) tiling -----------------------------------------------
    min_steps = 2 if B == 1 else 1            # keep both v7x TensorCores busy
    tN, Np = _choose_tile_n(N, x.dtype, D, min_steps=min_steps)
    x_in = x if Np == N else jnp.pad(x, ((0, 0), (0, Np - N), (0, 0)))

    grid = (B, Np // tN, n_dp)

    # Grid-invariant operands: single VMEM buffer (no double-buffer waste).
    inv = dict(pipeline_mode=pl.Buffered(1))
    w_kwargs = inv if n_dp == 1 else {}
    bias_kwargs = inv if n_dp == 1 else {}

    x_isz = jnp.dtype(x.dtype).itemsize
    mxu_isz = jnp.dtype(mxu_dtype).itemsize
    vmem_need = (
        2 * tN * D * x_isz                                   # x (double-buffered)
        + (1 if n_dp == 1 else 2) * D * tDp * mxu_isz        # weight slab
        + (1 if n_dp == 1 else 2) * tDp * 4                  # bias
        + 2 * D * 4                                          # gamma + beta
        + 2 * tN * out_tile_dp * x_isz                       # output
        + tN * D * mxu_isz                                   # y scratch
    )

    out = pl.pallas_call(
        _prenorm_linear_kernel,
        out_shape=jax.ShapeDtypeStruct((B, Np, D_out), x.dtype),
        grid_spec=pltpu.PrefetchScalarGridSpec(
            num_scalar_prefetch=0,
            grid=grid,
            in_specs=[
                # batch dim squeezed out of the kernel view
                pl.BlockSpec((None, tN, D), lambda bb, nn, dp: (bb, nn, 0)),
                pl.BlockSpec((1, D), lambda bb, nn, dp: (0, 0), **inv),
                pl.BlockSpec((1, D), lambda bb, nn, dp: (0, 0), **inv),
                pl.BlockSpec((D, tDp), lambda bb, nn, dp: (0, dp), **w_kwargs),
                pl.BlockSpec((1, tDp), lambda bb, nn, dp: (0, dp), **bias_kwargs),
            ],
            out_specs=pl.BlockSpec((None, tN, out_tile_dp),
                                   lambda bb, nn, dp: (bb, nn, dp)),
            scratch_shapes=[pltpu.VMEM((tN, D), mxu_dtype)],
        ),
        compiler_params=pltpu.CompilerParams(
            dimension_semantics=("parallel", "parallel", "arbitrary"),
            vmem_limit_bytes=_vmem_limit(vmem_need)),
    )(x_in, g2, be2, w_p, bias2)

    if Np != N:
        out = out[:, :N]
    return out


# ---------------------------------------------------------------------------
# Standalone LayerNorm kernel (fallback path when fn is not a fusable Linear)
# ---------------------------------------------------------------------------
def _layernorm_kernel(x_ref, g_ref, be_ref, o_ref):
    x = x_ref[...].astype(jnp.float32)
    inv_d = jnp.float32(1.0 / x.shape[-1])
    mean = jnp.sum(x, axis=-1, keepdims=True) * inv_d
    xc = x - mean
    var = jnp.sum(xc * xc, axis=-1, keepdims=True) * inv_d
    y = (xc * jax.lax.rsqrt(var + LN_EPS) * g_ref[...].astype(jnp.float32)
         + be_ref[...].astype(jnp.float32))
    o_ref[...] = y.astype(o_ref.dtype)


def layernorm_pallas(x, gamma, beta):
    B, N, D = x.shape
    g2 = gamma.reshape(1, D).astype(jnp.float32)
    be2 = beta.reshape(1, D).astype(jnp.float32)

    min_steps = 2 if B == 1 else 1
    tN, Np = _choose_tile_n(N, x.dtype, D, min_steps=min_steps)
    x_in = x if Np == N else jnp.pad(x, ((0, 0), (0, Np - N), (0, 0)))
    grid = (B, Np // tN)

    inv = dict(pipeline_mode=pl.Buffered(1))
    x_isz = jnp.dtype(x.dtype).itemsize
    vmem_need = 2 * tN * D * x_isz * 2 + 2 * D * 4   # x + out double-buffered

    out = pl.pallas_call(
        _layernorm_kernel,
        out_shape=jax.ShapeDtypeStruct((B, Np, D), x.dtype),
        grid_spec=pltpu.PrefetchScalarGridSpec(
            num_scalar_prefetch=0,
            grid=grid,
            in_specs=[
                pl.BlockSpec((None, tN, D), lambda bb, nn: (bb, nn, 0)),
                pl.BlockSpec((1, D), lambda bb, nn: (0, 0), **inv),
                pl.BlockSpec((1, D), lambda bb, nn: (0, 0), **inv),
            ],
            out_specs=pl.BlockSpec((None, tN, D), lambda bb, nn: (bb, nn, 0)),
        ),
        compiler_params=pltpu.CompilerParams(
            dimension_semantics=("parallel", "parallel"),
            vmem_limit_bytes=_vmem_limit(vmem_need)),
    )(x_in, g2, be2)

    if Np != N:
        out = out[:, :N]
    return out


# ---------------------------------------------------------------------------
# PreNorm module (JAX/Pallas)
# ---------------------------------------------------------------------------
class PallasLinear:
    """Linear(D -> D_out). When wrapped by PreNorm, it is fused with the
    LayerNorm into a single Pallas kernel."""

    def __init__(self, w, b):
        self.w = w
        self.b = b

    def __call__(self, x):
        return jnp.einsum("bnd,de->bne", x, self.w) + self.b


class PreNorm:
    def __init__(self, dim, fn):
        self.fn = fn
        # nn.LayerNorm(dim) default init: weight=1, bias=0
        self.gamma = jnp.ones((dim,), dtype=jnp.float32)
        self.beta = jnp.zeros((dim,), dtype=jnp.float32)

    def __call__(self, x, **kwargs):
        if isinstance(self.fn, PallasLinear) and not kwargs:
            # Fused LayerNorm + Linear: one HBM pass over x.
            return prenorm_linear_pallas(x, self.gamma, self.beta,
                                         self.fn.w, self.fn.b)
        # Generic fn: Pallas LayerNorm, then user fn (arbitrary JAX).
        x = layernorm_pallas(x, self.gamma, self.beta)
        return self.fn(x, **kwargs)


if __name__ == "__main__":
    B, N, D, D_OUT = 2, 8, 32, 32

    key = jax.random.PRNGKey(0)
    kx, kw, kb = jax.random.split(key, 3)
    x = jax.random.normal(kx, (B, N, D), dtype=jnp.float32)

    # Deterministic params for the wrapped fn (a Linear layer).
    w = jax.random.normal(kw, (D, D_OUT), dtype=jnp.float32) * 0.02
    b = jax.random.normal(kb, (D_OUT,), dtype=jnp.float32) * 0.01

    # Pure-JAX reference (matches torch.nn.LayerNorm semantics).
    mean = jnp.mean(x, axis=-1, keepdims=True)
    var = jnp.mean(jnp.square(x - mean), axis=-1, keepdims=True)
    x_hat_ref = (x - mean) / jnp.sqrt(var + LN_EPS)
    ref = jnp.einsum("bnd,de->bne", x_hat_ref, w) + b

    # 1) Fused path (fn is a PallasLinear).
    module = PreNorm(D, PallasLinear(w, b))
    out = jax.block_until_ready(module(x))
    assert out.shape == (B, N, D_OUT)
    assert jnp.allclose(out, ref, atol=1e-4, rtol=1e-4)

    # 2) Generic (unfused) path: Pallas LayerNorm + arbitrary fn.
    module2 = PreNorm(D, lambda h: jnp.einsum("bnd,de->bne", h, w) + b)
    out2 = jax.block_until_ready(module2(x))
    assert out2.shape == (B, N, D_OUT)
    assert jnp.allclose(out2, ref, atol=1e-4, rtol=1e-4)

    print("KERNEL_OK")
</pallas_src>

<mosaic_0001>
module attributes {stable_mosaic.version = 11 : i64} {
  func.func @_prenorm_linear_kernel(%arg0: i32, %arg1: i32, %arg2: i32, %arg3: memref<1x8x32xf32, #tpu.memory_space<vmem>>, %arg4: memref<1x32xf32, #tpu.memory_space<vmem>>, %arg5: memref<1x32xf32, #tpu.memory_space<vmem>>, %arg6: memref<32x128xf32, #tpu.memory_space<vmem>>, %arg7: memref<1x128xf32, #tpu.memory_space<vmem>>, %arg8: memref<1x8x32xf32, #tpu.memory_space<vmem>>, %arg9: memref<8x32xf32, #tpu.memory_space<vmem>>) attributes {dimension_semantics = [#tpu.dimension_semantics<parallel>, #tpu.dimension_semantics<parallel>, #tpu.dimension_semantics<arbitrary>], iteration_bounds = array<i64: 2, 1, 1>, scalar_prefetch = 0 : i64, scratch_operands = 1 : i64, tpu.core_type = #tpu.core_type<tc>, window_params = [{transform_indices = @transform_0, window_bounds = array<i64: 1, 8, 32>}, {pipeline_mode = #tpu.pipeline_mode<synchronous>, transform_indices = @transform_1, window_bounds = array<i64: 1, 32>}, {pipeline_mode = #tpu.pipeline_mode<synchronous>, transform_indices = @transform_2, window_bounds = array<i64: 1, 32>}, {pipeline_mode = #tpu.pipeline_mode<synchronous>, transform_indices = @transform_3, window_bounds = array<i64: 32, 128>}, {pipeline_mode = #tpu.pipeline_mode<synchronous>, transform_indices = @transform_4, window_bounds = array<i64: 1, 128>}, {transform_indices = @transform_5, window_bounds = array<i64: 1, 8, 32>}]} {
    %c0_i32 = arith.constant 0 : i32
    %0 = arith.cmpi eq, %arg2, %c0_i32 : i32
    %1 = arith.extui %0 : i1 to i32
    %c0_i32_0 = arith.constant 0 : i32
    %2 = arith.cmpi ne, %1, %c0_i32_0 : i32
    scf.if %2 {
      %c0_9 = arith.constant 0 : index
      %c0_10 = arith.constant 0 : index
      %c0_11 = arith.constant 0 : index
      %13 = vector.load %arg3[%c0_9, %c0_10, %c0_11] : memref<1x8x32xf32, #tpu.memory_space<vmem>>, vector<1x8x32xf32>
      %14 = vector.shape_cast %13 : vector<1x8x32xf32> to vector<8x32xf32>
      %cst_12 = arith.constant dense<0.000000e+00> : vector<8xf32>
      %15 = vector.multi_reduction <add>, %14, %cst_12 [1] : vector<8x32xf32> to vector<8xf32>
      %16 = vector.shape_cast %15 : vector<8xf32> to vector<8x1xf32>
      %cst_13 = arith.constant 3.125000e-02 : f32
      %17 = vector.broadcast %cst_13 : f32 to vector<8x1xf32>
      %18 = arith.mulf %16, %17 : vector<8x1xf32>
      %19 = vector.broadcast %18 : vector<8x1xf32> to vector<8x32xf32>
      %20 = arith.subf %14, %19 : vector<8x32xf32>
      %21 = arith.mulf %20, %20 : vector<8x32xf32>
      %cst_14 = arith.constant dense<0.000000e+00> : vector<8xf32>
      %22 = vector.multi_reduction <add>, %21, %cst_14 [1] : vector<8x32xf32> to vector<8xf32>
      %23 = vector.shape_cast %22 : vector<8xf32> to vector<8x1xf32>
      %cst_15 = arith.constant 3.125000e-02 : f32
      %24 = vector.broadcast %cst_15 : f32 to vector<8x1xf32>
      %25 = arith.mulf %23, %24 : vector<8x1xf32>
      %cst_16 = arith.constant 9.99999974E-6 : f32
      %26 = vector.broadcast %cst_16 : f32 to vector<8x1xf32>
      %27 = arith.addf %25, %26 : vector<8x1xf32>
      %28 = math.rsqrt %27 : vector<8x1xf32>
      %29 = vector.broadcast %28 : vector<8x1xf32> to vector<8x32xf32>
      %30 = arith.mulf %20, %29 : vector<8x32xf32>
      %c0_17 = arith.constant 0 : index
      %c0_18 = arith.constant 0 : index
      %31 = vector.load %arg4[%c0_17, %c0_18] : memref<1x32xf32, #tpu.memory_space<vmem>>, vector<1x32xf32>
      %32 = vector.broadcast %31 : vector<1x32xf32> to vector<8x32xf32>
      %33 = arith.mulf %30, %32 : vector<8x32xf32>
      %c0_19 = arith.constant 0 : index
      %c0_20 = arith.constant 0 : index
      %34 = vector.load %arg5[%c0_19, %c0_20] : memref<1x32xf32, #tpu.memory_space<vmem>>, vector<1x32xf32>
      %35 = vector.broadcast %34 : vector<1x32xf32> to vector<8x32xf32>
      %36 = arith.addf %33, %35 : vector<8x32xf32>
      %c0_21 = arith.constant 0 : index
      %c0_22 = arith.constant 0 : index
      %37 = vector.load %arg9[%c0_21, %c0_22] : memref<8x32xf32, #tpu.memory_space<vmem>>, vector<8x32xf32>
      tpu.vector_store %arg9[%c0_21, %c0_22], %36 {strides = array<i32>} : memref<8x32xf32, #tpu.memory_space<vmem>>, vector<8x32xf32>,
    } else {
    }
    %c0 = arith.constant 0 : index
    %c0_1 = arith.constant 0 : index
    %3 = vector.load %arg9[%c0, %c0_1] : memref<8x32xf32, #tpu.memory_space<vmem>>, vector<8x32xf32>
    %c0_2 = arith.constant 0 : index
    %c0_3 = arith.constant 0 : index
    %4 = vector.load %arg6[%c0_2, %c0_3] : memref<32x128xf32, #tpu.memory_space<vmem>>, vector<32x128xf32>
    %cst = arith.constant dense<0.000000e+00> : vector<8x128xf32>
    %5 = tpu.matmul %3, %4, %cst {dimension_numbers = #tpu.dot_dimension_numbers<[1], [0], [0], [1], [0, 0, 1, 1], [], []>} : vector<8x32xf32>, vector<32x128xf32>, vector<8x128xf32> -> vector<8x128xf32>
    %c0_4 = arith.constant 0 : index
    %c0_5 = arith.constant 0 : index
    %6 = vector.load %arg7[%c0_4, %c0_5] : memref<1x128xf32, #tpu.memory_space<vmem>>, vector<1x128xf32>
    %7 = vector.broadcast %6 : vector<1x128xf32> to vector<8x128xf32>
    %8 = arith.addf %5, %7 : vector<8x128xf32>
    %9 = vector.extract_strided_slice %8 {offsets = [0, 0], sizes = [8, 32], strides = [1, 1]} : vector<8x128xf32> to vector<8x32xf32>
    %c0_6 = arith.constant 0 : index
    %c0_7 = arith.constant 0 : index
    %c0_8 = arith.constant 0 : index
    %10 = vector.load %arg8[%c0_6, %c0_7, %c0_8] : memref<1x8x32xf32, #tpu.memory_space<vmem>>, vector<1x8x32xf32>
    %11 = vector.shape_cast %10 : vector<1x8x32xf32> to vector<8x32xf32>
    %12 = vector.shape_cast %9 : vector<8x32xf32> to vector<1x8x32xf32>
    tpu.vector_store %arg8[%c0_6, %c0_7, %c0_8], %12 {strides = array<i32>} : memref<1x8x32xf32, #tpu.memory_space<vmem>>, vector<1x8x32xf32>,
    return
  }
  func.func @transform_0(%arg0: i32, %arg1: i32, %arg2: i32) -> (i32, i32, i32) {
    %c0_i32 = arith.constant 0 : i32
    %c0_i32_0 = arith.constant 0 : i32
    return %arg0, %arg1, %c0_i32 : i32, i32, i32
  }
  func.func @transform_1(%arg0: i32, %arg1: i32, %arg2: i32) -> (i32, i32) {
    %c0_i32 = arith.constant 0 : i32
    %c0_i32_0 = arith.constant 0 : i32
    %c0_i32_1 = arith.constant 0 : i32
    return %c0_i32, %c0_i32_0 : i32, i32
  }
  func.func @transform_2(%arg0: i32, %arg1: i32, %arg2: i32) -> (i32, i32) {
    %c0_i32 = arith.constant 0 : i32
    %c0_i32_0 = arith.constant 0 : i32
    %c0_i32_1 = arith.constant 0 : i32
    return %c0_i32, %c0_i32_0 : i32, i32
  }
  func.func @transform_3(%arg0: i32, %arg1: i32, %arg2: i32) -> (i32, i32) {
    %c0_i32 = arith.constant 0 : i32
    %c0_i32_0 = arith.constant 0 : i32
    return %c0_i32, %arg2 : i32, i32
  }
  func.func @transform_4(%arg0: i32, %arg1: i32, %arg2: i32) -> (i32, i32) {
    %c0_i32 = arith.constant 0 : i32
    %c0_i32_0 = arith.constant 0 : i32
    return %c0_i32, %arg2 : i32, i32
  }
  func.func @transform_5(%arg0: i32, %arg1: i32, %arg2: i32) -> (i32, i32, i32) {
    %c0_i32 = arith.constant 0 : i32
    return %arg0, %arg1, %arg2 : i32, i32, i32
  }
}

</mosaic_0001>

<llo_original>
// kernel: tpu_custom_call.1
$region0: #{tpu_custom_call.1}
  #allocation0 [shape = 'u32[]', space=smem, size = 0x4, offset = 0x4, fixed_abs, tag = 'smem constant byte address 0x4 - core index']
  #allocation1 [shape = 'u32[144,128]{1,0:T(1,128)}', space=vmem, size = 0x12000, scoped, tag = 'internal scratch']
  #allocation2 [shape = 'f32[8,32]{1,0:T(8,128)}', space=vmem, size = 0x1000, scoped, tag = 'scratch operand']
  %s0 = inlined_call_operand.hbm [shape: f32[2,8,32], index: 0, kind: input, shape index: {}]
  %s1 = inlined_call_operand.vmem [shape: f32[1,32], index: 1, kind: input, shape index: {}]
  %s2 = inlined_call_operand.vmem [shape: f32[1,32], index: 2, kind: input, shape index: {}]
  %s3 = inlined_call_operand.hbm [shape: f32[32,128], index: 3, kind: input, shape index: {}]
  %s4 = inlined_call_operand.vmem [shape: f32[1,128], index: 4, kind: input, shape index: {}]
  %s5 = inlined_call_operand.hbm [shape: f32[2,8,32], index: 5, kind: output, shape index: {}]
  %s6 = sld [smem:[#allocation0]]
  $region65: #{tpu_custom_call.1} parent=0
    _
  %s8 = ssub.s32 1, %s6
  %s9 = scalar_select 0, %s8, %s6
  $region1: #{tpu_custom_call.1} parent=0
    #allocation3 [shape = 'u8[8192]{0}', space=vmem, size = 0x2000, scoped, tag = 'input window, operand 0']
    #allocation4 [shape = 's32[2]{0}', space=sflag, size = 0x8, scoped, tag = 'scoped memory for tpu_custom_call.1']
    #allocation5 [shape = 's32[2]{0}', space=sflag, size = 0x8, scoped, tag = 'scoped memory for tpu_custom_call.1']
    #allocation6 [shape = 'u8[16384]{0}', space=vmem, size = 0x4000, scoped, tag = 'input window, operand 3, single buffered']
    #allocation7 [shape = 's32[1]{0}', space=sflag, size = 0x4, scoped, tag = 'scoped memory for tpu_custom_call.1']
    #allocation8 [shape = 'u8[8192]{0}', space=vmem, size = 0x2000, scoped, tag = 'output window, operand 0']
    %10 = vsyncpa [#allocation4], 0
    %s11 = scalar_lea.sflag [#allocation4], 1
    %12 = vsyncpa %s11, 0
    %13 = vsyncpa [#allocation7], 0
    %14 = vsyncpa [#allocation5], 0
    %s15 = scalar_lea.sflag [#allocation5], 1
    %16 = vsyncpa %s15, 0
    loop: start=0, step=1, limit=4
    $region2: #{tpu_custom_call.1} parent=1 // loop_pre_header
      _
    $region3: #{tpu_custom_call.1} parent=1 // loop_header
      %s18 = sphi 0, %s22
      %p19 = scmp.ge.s32.totalorder %s18, 4
      %s25 = sphi 0, %s44
      %s26 = sphi 0, %s40
      %s27 = sphi 0, %s36
      %s28 = sphi 0, %s25
      %s29 = sphi 0, %s26
      %s30 = sphi 0, %s27
      %s31 = sphi 0, %s28
      %s32 = sphi 0, %s29
      %s33 = sphi 0, %s30
      %s49 = sphi 0, %s51
      %s52 = sphi 0, %s49
      %s53 = sphi 0, %s52
      %s69 = sphi 0, %s53
      %s73 = sphi 0, %s73
      %s75 = sphi 0, %s73
      %s76 = sphi 0, %s75
      %s90 = sphi 0, %s76
      %s94 = sphi 0, %s94
      %s96 = sphi 0, %s94
      %s97 = sphi 0, %s96
      %s111 = sphi 0, %s97
      %s117 = sphi 0, %s119
      %s120 = sphi 0, %s117
      %s121 = sphi 0, %s120
      %s137 = sphi 0, %s121
      %s143 = sphi 0, %s145
      %s146 = sphi 0, %s143
      %s147 = sphi 0, %s146
      %s163 = sphi 0, %s147
      %s173 = sphi 0, %s175
      %s176 = sphi 0, %s173
      %s177 = sphi 0, %s176
      %s193 = sphi 0, %s177
    $region4: #{tpu_custom_call.1} parent=1 // loop_header_branch
      %21 = sbr.rel (%p19) target = $region8
    $region5: #{tpu_custom_call.1} parent=1 // loop_body
      %s23 = ssub.s32 %s18, 1
      %s24 = ssub.s32 %s18, 2
      %s34 = sadd.s32 1, %s27
      %p35 = scmp.ge.s32.totalorder %s34, 1
      %s36 = scalar_select %p35, 0, %s34
      %s37 = sadd.s32 1, %s26
      %s38 = scalar_select %p35, %s37, %s26
      %p39 = scmp.ge.s32.totalorder %s38, 1
      %s40 = scalar_select %p39, 0, %s38
      %s41 = sadd.s32 1, %s25
      %s42 = scalar_select %p39, %s41, %s25
      %p43 = scmp.ge.s32.totalorder %s42, 2
      %s44 = scalar_select %p43, 0, %s42
      %s45 = ssub.s32 %s25, %s44
      %s46 = ssub.s32 %s26, %s40
      %s47 = sor.u32 %s45, %s46
      %p48 = scmp.eq.s32.totalorder %s47, 0
      %s50 = sadd.s32 %s49, 1
      %s51 = scalar_select %p48, %s49, %s50
      %p54 = pneg %p48
      %p55 = scmp.eq.s32.totalorder %s18, 1
      %p56 = por %p54, %p55
      %p57 = scmp.ne.s32.totalorder %s49, %s52
      %p58 = scmp.eq.s32.totalorder %s18, 0
      %p59 = por %p57, %p58
      %p60 = scmp.ne.s32.totalorder %s49, %s52
      %p61 = scmp.eq.s32.totalorder %s23, 1
      %p62 = por %p60, %p61
      %p63 = scmp.ne.s32.totalorder %s52, %s53
      %p64 = scmp.eq.s32.totalorder %s23, 0
      %p65 = por %p63, %p64
      %p66 = scmp.ne.s32.totalorder %s52, %s53
      %p67 = scmp.eq.s32.totalorder %s24, 1
      %p68 = por %p66, %p67
      %p70 = scmp.ne.s32.totalorder %s53, %s69
      %p71 = scmp.eq.s32.totalorder %s24, 0
      %p72 = por %p70, %p71
      %s74 = sadd.s32 %s73, 1
      %p77 = scmp.eq.s32.totalorder %s18, 1
      %p78 = scmp.ne.s32.totalorder %s73, %s75
      %p79 = scmp.eq.s32.totalorder %s18, 0
      %p80 = por %p78, %p79
      %p81 = scmp.ne.s32.totalorder %s73, %s75
      %p82 = scmp.eq.s32.totalorder %s23, 1
      %p83 = por %p81, %p82
      %p84 = scmp.ne.s32.totalorder %s75, %s76
      %p85 = scmp.eq.s32.totalorder %s23, 0
      %p86 = por %p84, %p85
      %p87 = scmp.ne.s32.totalorder %s75, %s76
      %p88 = scmp.eq.s32.totalorder %s24, 1
      %p89 = por %p87, %p88
      %p91 = scmp.ne.s32.totalorder %s76, %s90
      %p92 = scmp.eq.s32.totalorder %s24, 0
      %p93 = por %p91, %p92
      %s95 = sadd.s32 %s94, 1
      %p98 = scmp.eq.s32.totalorder %s18, 1
      %p99 = scmp.ne.s32.totalorder %s94, %s96
      %p100 = scmp.eq.s32.totalorder %s18, 0
      %p101 = por %p99, %p100
      %p102 = scmp.ne.s32.totalorder %s94, %s96
      %p103 = scmp.eq.s32.totalorder %s23, 1
      %p104 = por %p102, %p103
      %p105 = scmp.ne.s32.totalorder %s96, %s97
      %p106 = scmp.eq.s32.totalorder %s23, 0
      %p107 = por %p105, %p106
      %p108 = scmp.ne.s32.totalorder %s96, %s97
      %p109 = scmp.eq.s32.totalorder %s24, 1
      %p110 = por %p108, %p109
      %p112 = scmp.ne.s32.totalorder %s97, %s111
      %p113 = scmp.eq.s32.totalorder %s24, 0
      %p114 = por %p112, %p113
      %s115 = ssub.s32 %s27, %s36
      %p116 = scmp.eq.s32.totalorder %s115, 0
      %s118 = sadd.s32 %s117, 1
      %s119 = scalar_select %p116, %s117, %s118
      %p122 = pneg %p116
      %p123 = scmp.eq.s32.totalorder %s18, 1
      %p124 = por %p122, %p123
      %p125 = scmp.ne.s32.totalorder %s117, %s120
      %p126 = scmp.eq.s32.totalorder %s18, 0
      %p127 = por %p125, %p126
      %p128 = scmp.ne.s32.totalorder %s117, %s120
      %p129 = scmp.eq.s32.totalorder %s23, 1
      %p130 = por %p128, %p129
      %p131 = scmp.ne.s32.totalorder %s120, %s121
      %p132 = scmp.eq.s32.totalorder %s23, 0
      %p133 = por %p131, %p132
      %p134 = scmp.ne.s32.totalorder %s120, %s121
      %p135 = scmp.eq.s32.totalorder %s24, 1
      %p136 = por %p134, %p135
      %p138 = scmp.ne.s32.totalorder %s121, %s137
      %p139 = scmp.eq.s32.totalorder %s24, 0
      %p140 = por %p138, %p139
      %s141 = ssub.s32 %s27, %s36
      %p142 = scmp.eq.s32.totalorder %s141, 0
      %s144 = sadd.s32 %s143, 1
      %s145 = scalar_select %p142, %s143, %s144
      %p148 = pneg %p142
      %p149 = scmp.eq.s32.totalorder %s18, 1
      %p150 = por %p148, %p149
      %p151 = scmp.ne.s32.totalorder %s143, %s146
      %p152 = scmp.eq.s32.totalorder %s18, 0
      %p153 = por %p151, %p152
      %p154 = scmp.ne.s32.totalorder %s143, %s146
      %p155 = scmp.eq.s32.totalorder %s23, 1
      %p156 = por %p154, %p155
      %p157 = scmp.ne.s32.totalorder %s146, %s147
      %p158 = scmp.eq.s32.totalorder %s23, 0
      %p159 = por %p157, %p158
      %p160 = scmp.ne.s32.totalorder %s146, %s147
      %p161 = scmp.eq.s32.totalorder %s24, 1
      %p162 = por %p160, %p161
      %p164 = scmp.ne.s32.totalorder %s147, %s163
      %p165 = scmp.eq.s32.totalorder %s24, 0
      %p166 = por %p164, %p165
      %s167 = ssub.s32 %s25, %s44
      %s168 = ssub.s32 %s26, %s40
      %s169 = sor.u32 %s167, %s168
      %s170 = ssub.s32 %s27, %s36
      %s171 = sor.u32 %s169, %s170
      %p172 = scmp.eq.s32.totalorder %s171, 0
      %s174 = sadd.s32 %s173, 1
      %s175 = scalar_select %p172, %s173, %s174
      %p178 = pneg %p172
      %p179 = scmp.eq.s32.totalorder %s18, 1
      %p180 = por %p178, %p179
      %p181 = scmp.ne.s32.totalorder %s173, %s176
      %p182 = scmp.eq.s32.totalorder %s18, 0
      %p183 = por %p181, %p182
      %p184 = scmp.ne.s32.totalorder %s173, %s176
      %p185 = scmp.eq.s32.totalorder %s23, 1
      %p186 = por %p184, %p185
      %p187 = scmp.ne.s32.totalorder %s176, %s177
      %p188 = scmp.eq.s32.totalorder %s23, 0
      %p189 = por %p187, %p188
      %p190 = scmp.ne.s32.totalorder %s176, %s177
      %p191 = scmp.eq.s32.totalorder %s24, 1
      %p192 = por %p190, %p191
      %p194 = scmp.ne.s32.totalorder %s177, %s193
      %p195 = scmp.eq.s32.totalorder %s24, 0
      %p196 = por %p194, %p195
      %p197 = scmp.le.s32.totalorder 1, %s18
      %p198 = scmp.lt.s32.totalorder %s18, 3
      %p199 = pnand %p197, %p198
      %p200 = pneg %p199
      // Predicated region
      $region9: #{tpu_custom_call.1} parent=5 // pred_check
        _
      $region10: #{tpu_custom_call.1} parent=5 // pred_check_branch
        %202 = sbr.rel (%p199) target = $region12
      $region11: #{tpu_custom_call.1} parent=5 // pred_region
        %s203 = ssub.s32 %s18, 1
        // Predicated region
        $region13: #{tpu_custom_call.1} parent=11 // pred_check
          %p204 = pneg %p86
        $region14: #{tpu_custom_call.1} parent=11 // pred_check_branch
          %206 = sbr.rel (%p204) target = $region16
        $region15: #{tpu_custom_call.1} parent=11 // pred_region
          _
        $region16: #{tpu_custom_call.1} parent=11 // pred_fallthru
          _
        // Predicated region
        $region17: #{tpu_custom_call.1} parent=11 // pred_check
          %p207 = pneg %p107
        $region18: #{tpu_custom_call.1} parent=11 // pred_check_branch
          %209 = sbr.rel (%p207) target = $region20
        $region19: #{tpu_custom_call.1} parent=11 // pred_region
          _
        $region20: #{tpu_custom_call.1} parent=11 // pred_fallthru
          _
        // Predicated region
        $region21: #{tpu_custom_call.1} parent=11 // pred_check
          %p210 = pneg %p133
        $region22: #{tpu_custom_call.1} parent=11 // pred_check_branch
          %212 = sbr.rel (%p210) target = $region24
        $region23: #{tpu_custom_call.1} parent=11 // pred_region
          %s214 = ssub.s32 512, 512
          %215 = vsyncadd [#allocation7], %s214
          %s216 = smul.addr %s30, 128
          %s217 = scalar_lea.hbm %s3, %s216
          %s218 = sshll.u32 [#allocation6], 4
          %s219 = int_to_ptr.vmem [resolvable:$true] %s218
          %224 = dma.hbm_to_vmem [thread:$0]  %s217, 512, %s219, [#allocation7], 128, 128, 8
        $region24: #{tpu_custom_call.1} parent=11 // pred_fallthru
          _
        // Predicated region
        $region25: #{tpu_custom_call.1} parent=11 // pred_check
          %p225 = pneg %p159
        $region26: #{tpu_custom_call.1} parent=11 // pred_check_branch
          %227 = sbr.rel (%p225) target = $region28
        $region27: #{tpu_custom_call.1} parent=11 // pred_region
          %p228 = scmp.lt.s32.totalorder %s30, 0
          %s229 = scalar_select %p228, %s30, 0
          %s230 = scalar_lea.vmem %s4, %s229
        $region28: #{tpu_custom_call.1} parent=11 // pred_fallthru
          _
      $region12: #{tpu_custom_call.1} parent=5 // pred_fallthru
        _
      %p231 = scmp.lt.s32.totalorder %s18, 2
      // Predicated region
      $region29: #{tpu_custom_call.1} parent=5 // pred_check
        %p232 = pneg %p231
      $region30: #{tpu_custom_call.1} parent=5 // pred_check_branch
        %234 = sbr.rel (%p232) target = $region32
      $region31: #{tpu_custom_call.1} parent=5 // pred_region
        // Predicated region
        $region33: #{tpu_custom_call.1} parent=31 // pred_check
          %p235 = pneg %p59
        $region34: #{tpu_custom_call.1} parent=31 // pred_check_branch
          %237 = sbr.rel (%p235) target = $region36
        $region35: #{tpu_custom_call.1} parent=31 // pred_region
          %s238 = sand.u32 %s49, 1
          %s239 = scalar_lea.sflag [#allocation4], %s238
          %s240 = sand.u32 %s49, 1
          %s241 = smul.addr %s240, 8
          %s242 = scalar_lea.vmem [#allocation3], %s241
          %s244 = ssub.s32 128, 128
          %245 = vsyncadd %s239, %s244
          %s246 = sadd.s32 %s26, %s25
          %s247 = smul.addr %s246, 128
          %s248 = scalar_lea.hbm %s0, %s247
          %s250 = sshll.u32 %s242, 4
          %s251 = int_to_ptr.vmem [resolvable:$true] %s250
          %253 = dma.hbm_to_vmem [thread:$0]  %s248, 128, %s251, %s239
        $region36: #{tpu_custom_call.1} parent=31 // pred_fallthru
          _
      $region32: #{tpu_custom_call.1} parent=5 // pred_fallthru
        _
      %p254 = scmp.le.s32.totalorder 1, %s18
      %p255 = scmp.lt.s32.totalorder %s18, 3
      %p256 = pnand %p254, %p255
      %p257 = pneg %p256
      // Predicated region
      $region37: #{tpu_custom_call.1} parent=5 // pred_check
        _
      $region38: #{tpu_custom_call.1} parent=5 // pred_check_branch
        %259 = sbr.rel (%p256) target = $region40
      $region39: #{tpu_custom_call.1} parent=5 // pred_region
        %s260 = ssub.s32 %s18, 1
        %s261 = sand.u32 %s52, 1
        %s262 = scalar_lea.sflag [#allocation4], %s261
        %s263 = sand.u32 %s52, 1
        %s264 = smul.addr %s263, 8
        %s265 = scalar_lea.vmem [#allocation3], %s264
        // Predicated region
        $region41: #{tpu_custom_call.1} parent=39 // pred_check
          %p266 = pneg %p65
        $region42: #{tpu_custom_call.1} parent=39 // pred_check_branch
          %268 = sbr.rel (%p266) target = $region44
        $region43: #{tpu_custom_call.1} parent=39 // pred_region
          %269 = dma.done %s262, 128
        $region44: #{tpu_custom_call.1} parent=39 // pred_fallthru
          _
        // Predicated region
        $region45: #{tpu_custom_call.1} parent=39 // pred_check
          %p270 = pneg %p133
        $region46: #{tpu_custom_call.1} parent=39 // pred_check_branch
          %272 = sbr.rel (%p270) target = $region48
        $region47: #{tpu_custom_call.1} parent=39 // pred_region
          %273 = dma.done [#allocation7], 512
        $region48: #{tpu_custom_call.1} parent=39 // pred_fallthru
          _
        %s274 = sand.u32 %s52, 1
        %s275 = scalar_lea.sflag [#allocation4], %s274
        %s276 = sand.u32 %s52, 1
        %s277 = smul.addr %s276, 8
        %s278 = scalar_lea.vmem [#allocation3], %s277
        %p279 = pneg %p65
        %p280 = pneg %p62
        %p281 = pneg %p86
        %p282 = pneg %p83
        %p283 = pneg %p107
        %p284 = pneg %p104
        %p285 = pneg %p133
        %p286 = pneg %p130
        %p287 = scmp.lt.s32.totalorder %s30, 0
        %s288 = scalar_select %p287, %s30, 0
        %s289 = scalar_lea.vmem %s4, %s288
        %p290 = pneg %p159
        %p291 = pneg %p156
        %p292 = pneg %p189
        %p293 = pneg %p186
        %s294 = sand.u32 %s176, 1
        %s295 = scalar_lea.sflag [#allocation5], %s294
        %s296 = sand.u32 %s176, 1
        %s297 = smul.addr %s296, 8
        %s298 = scalar_lea.vmem [#allocation8], %s297
        %p299 = scmp.lt.s32.totalorder %s30, 0
        %s300 = scalar_select %p299, %s30, 0
        %s301 = scalar_lea.vmem %s4, %s300
        %p302 = scmp.eq.s32.totalorder %s30, 0
        // Predicated region
        $region49: #{tpu_custom_call.1} parent=39 // pred_check
          %p303 = pneg %p302
        $region50: #{tpu_custom_call.1} parent=39 // pred_check_branch
          %305 = sbr.rel (%p303) target = $region52
        $region51: #{tpu_custom_call.1} parent=39 // pred_region
          %v306 = vld [vmem:[%s265] sm:$0xff]
          %vm307 = vcmask 261120
          %v308 = vsel %vm307, %v306, 0.0
          %309 = vadd.xlane.f32.xlu0 %v308
          %v310 = vpop.xlane.xlu0 %309
          %v311 = vmul.f32 %v310, 0.03125
          %v312 = vsub.f32 %v306, %v311
          %v313 = vmul.f32 %v312, %v312
          %v314 = vsel %vm307, %v313, 0.0
          %315 = vadd.xlane.f32.xlu0 %v314
          %v316 = vpop.xlane.xlu0 %315
          %v317 = vmul.f32 %v316, 0.03125
          %v318 = vadd.f32 %v317, 1e-05
          %v319 = vrsqrt.pop %v318
          %v320 = vmul.f32 %v312, %v319
          %v321 = vld [vmem:[%s1] sm:$0x1]
          %v323 = vlaneseq
          %v324 = vshrl.u32 %v323, 7
          %v325 = vsub.s32 0, %v324
          %v326 = vrot.slane %v321, %v325
          %v328 = vmul.f32 %v320, %v326
          %v329 = vld [vmem:[%s2] sm:$0x1]
          %v331 = vlaneseq
          %v332 = vshrl.u32 %v331, 7
          %v333 = vsub.s32 0, %v332
          %v334 = vrot.slane %v329, %v333
          %v336 = vadd.f32 %v328, %v334
          %337 = vst.msk [vmem:[#allocation2] sm:$0xff] %vm307, %v336
        $region52: #{tpu_custom_call.1} parent=39 // pred_fallthru
          _
        %v338 = vld [vmem:[#allocation2] sm:$0xff]
        %v339 = vld [vmem:[#allocation6] sm:$0xff]
        %v340 = vld [vmem:[#allocation6 + $0x8] sm:$0xff]
        %v341 = vld [vmem:[#allocation6 + $0x10] sm:$0xff]
        %v342 = vld [vmem:[#allocation6 + $0x18] sm:$0xff]
        %v343 = vld [vmem:[%s301] sm:$0x1]
        %v345 = vlaneseq
        %v346 = vshrl.u32 %v345, 7
        %v347 = vsub.s32 0, %v346
        %v348 = vrot.slane %v343, %v347
        %vm350 = vcmask 261120
        %v352 = vsel %vm350, %v338, 0
        %354 = vmatprep.subr.mxu0 0.0
        %355 = vmatpush1.msra.mxu0 %v339
        %356 = vmatprep.subr.mxu0 0.0
        %357 = vmatpush1.msra.mxu0 %v340
        %358 = vmatprep.subr.mxu0 0.0
        %359 = vmatpush1.msra.mxu0 %v341
        %360 = vmatprep.subr.mxu0 0.0
        %361 = vmatpush1.msra.mxu0 %v342
        %362 = vmatprep.subr.mxu0 0.0
        %363 = vmatpush1.msra.mxu0 0.0
        %364 = vmatprep.subr.mxu0 0.0
        %365 = vmatpush1.msra.mxu0 0.0
        %366 = vmatprep.subr.mxu0 0.0
        %367 = vmatpush1.msra.mxu0 0.0
        %368 = vmatprep.subr.mxu0 0.0
        %369 = vmatpush1.msra.mxu0 0.0
        %370 = vmatprep.subr.mxu0 0.0
        %371 = vmatpush1.msra.mxu0 0.0
        %372 = vmatprep.subr.mxu0 0.0
        %373 = vmatpush1.msra.mxu0 0.0
        %374 = vmatprep.subr.mxu0 0.0
        %375 = vmatpush1.msra.mxu0 0.0
        %376 = vmatprep.subr.mxu0 0.0
        %377 = vmatpush1.msra.mxu0 0.0
        %378 = vmatprep.subr.mxu0 0.0
        %379 = vmatpush1.msra.mxu0 0.0
        %380 = vmatprep.subr.mxu0 0.0
        %381 = vmatpush1.msra.mxu0 0.0
        %382 = vmatprep.subr.mxu0 0.0
        %383 = vmatpush1.msra.mxu0 0.0
        %384 = vmatprep.subr.mxu0 0.0
        %385 = vmatpush1.msra.mxu0 0.0
        %386 = vmatprep.subr.mxu0 0.0
        %387 = vmatpush1.msra.mxu0 0.0
        %388 = vmatprep.subr.mxu0 0.0
        %389 = vmatpush1.msra.mxu0 0.0
        %390 = vmatprep.subr.mxu0 0.0
        %391 = vmatpush1.msra.mxu0 0.0
        %392 = vmatprep.subr.mxu0 0.0
        %393 = vmatpush1.msra.mxu0 0.0
        %394 = vmatprep.subr.mxu0 0.0
        %395 = vmatpush1.msra.mxu0 0.0
        %396 = vmatprep.subr.mxu0 0.0
        %397 = vmatpush1.msra.mxu0 0.0
        %398 = vmatprep.subr.mxu0 0.0
        %399 = vmatpush1.msra.mxu0 0.0
        %400 = vmatprep.subr.mxu0 0.0
        %401 = vmatpush1.msra.mxu0 0.0
        %402 = vmatprep.subr.mxu0 0.0
        %403 = vmatpush1.msra.mxu0 0.0
        %404 = vmatprep.subr.mxu0 0.0
        %405 = vmatpush1.msra.mxu0 0.0
        %406 = vmatprep.subr.mxu0 0.0
        %407 = vmatpush1.msra.mxu0 0.0
        %408 = vmatprep.subr.mxu0 0.0
        %409 = vmatpush1.msra.mxu0 0.0
        %410 = vmatprep.subr.mxu0 0.0
        %411 = vmatpush1.msra.mxu0 0.0
        %412 = vmatprep.subr.mxu0 0.0
        %413 = vmatpush1.msra.mxu0 0.0
        %414 = vmatprep.subr.mxu0 0.0
        %415 = vmatpush1.msra.mxu0 0.0
        %416 = vmatprep.subr.mxu0 0.0
        %417 = vmatpush1.msra.mxu0 0.0
        %418 = vmatprep.mubr.f32.mxu0 0.0
        %419 = vmatmul.mubr.f32.gmra.mrb[0].mxu0 %v352
        %v420 = vpop.f32.mrb[0].mxu0
        %v421 = vadd.f32 %v348, %v420
        %v422 = vpop.f32.mrb[0].mxu0
        %423 = vdwg.mxu0
        %424 = vst.msk [vmem:[%s298] sm:$0xff] %vm350, %v421
        %s425 = sand.u32 %s176, 1
        %s426 = scalar_lea.sflag [#allocation5], %s425
        %s427 = sand.u32 %s176, 1
        %s428 = smul.addr %s427, 8
        %s429 = scalar_lea.vmem [#allocation8], %s428
        // Predicated region
        $region53: #{tpu_custom_call.1} parent=39 // pred_check
          %p430 = pneg %p186
        $region54: #{tpu_custom_call.1} parent=39 // pred_check_branch
          %432 = sbr.rel (%p430) target = $region56
        $region55: #{tpu_custom_call.1} parent=39 // pred_region
          %s434 = ssub.s32 128, 128
          %435 = vsyncadd %s426, %s434
          %s436 = sadd.s32 %s30, %s29
          %s437 = sadd.s32 %s436, %s28
          %s438 = smul.addr %s437, 128
          %s439 = scalar_lea.hbm %s5, %s438
          %s441 = sshll.u32 %s429, 4
          %s442 = int_to_ptr.vmem [resolvable:$true] %s441
          %444 = dma.vmem_to_hbm [thread:$0]  %s442, 128, %s439, %s426
        $region56: #{tpu_custom_call.1} parent=39 // pred_fallthru
          _
      $region40: #{tpu_custom_call.1} parent=5 // pred_fallthru
        _
      %p445 = scmp.le.s32.totalorder 2, %s18
      // Predicated region
      $region57: #{tpu_custom_call.1} parent=5 // pred_check
        %p446 = pneg %p445
      $region58: #{tpu_custom_call.1} parent=5 // pred_check_branch
        %448 = sbr.rel (%p446) target = $region60
      $region59: #{tpu_custom_call.1} parent=5 // pred_region
        %s449 = ssub.s32 %s18, 2
        // Predicated region
        $region61: #{tpu_custom_call.1} parent=59 // pred_check
          %p450 = pneg %p192
        $region62: #{tpu_custom_call.1} parent=59 // pred_check_branch
          %452 = sbr.rel (%p450) target = $region64
        $region63: #{tpu_custom_call.1} parent=59 // pred_region
          %s453 = sand.u32 %s177, 1
          %s454 = scalar_lea.sflag [#allocation5], %s453
          %s455 = sand.u32 %s177, 1
          %s456 = smul.addr %s455, 8
          %s457 = scalar_lea.vmem [#allocation8], %s456
          %458 = dma.done %s454, 128
        $region64: #{tpu_custom_call.1} parent=59 // pred_fallthru
          _
      $region60: #{tpu_custom_call.1} parent=5 // pred_fallthru
        _
    $region6: #{tpu_custom_call.1} parent=1 // loop_footer
      %s22 = sadd.s32 1, %s18
    $region7: #{tpu_custom_call.1} parent=1 // loop_footer_branch
      %17 = sbr.rel target = $region3
    $region8: #{tpu_custom_call.1} parent=1 // loop_exit
      _
    %459 = vsyncpa [#allocation4], 1
    %s460 = scalar_lea.sflag [#allocation4], 1
    %461 = vsyncpa %s460, 1
    %462 = vsyncpa [#allocation7], 1
    %463 = vsyncpa [#allocation5], 1
    %s464 = scalar_lea.sflag [#allocation5], 1
    %465 = vsyncpa %s464, 1

</llo_original>
